<compile_context>
chip_gen: v7x
topology: tpu7x:2x2x1
jax: 0.10.0
libtpu: 0.0.40
codegen_flags: <defaults>
</compile_context>

<pallas_src>
import jax
import jax.numpy as jnp
from jax.experimental import pallas as pl
from jax.experimental.pallas import tpu as pltpu

_LANE = 128  # lane width (last dim)


def _linreg_kernel(w_ref, b_ref, x_ref, o_ref):
    # w_ref / b_ref: shape-(1,) f32 scalars in SMEM; x_ref / o_ref: (tm, tn) VMEM tiles.
    o_ref[...] = (w_ref[0] * x_ref[...] + b_ref[0]).astype(o_ref.dtype)


def _round_up(v, m):
    return ((v + m - 1) // m) * m


def _sublane(dtype):
    # Native sublane tiling: 8 for 4-byte, 16 for 2-byte, 32 for 1-byte dtypes.
    return max(8, 32 // jnp.dtype(dtype).itemsize)


def _choose_tiles(M, N, dtype, *, target_tile_bytes, vmem_budget_bytes, min_grid_steps):
    """Pick (tm, tn, grid_m, grid_n).

    * Full-width rows (tn == N, last block dim equals the array dim) whenever a
      single sublane-group of rows fits the double-buffered VMEM budget.
    * Otherwise lane-dense 128-multiple column tiles (2-D grid) to bound VMEM.
    * Row tile sized for ~target_tile_bytes (amortize ~0.35 us/grid-step), and
      shrunk if needed so there are >= min_grid_steps total steps (>= 2 per
      TensorCore on v7x megacore).
    """
    itemsize = jnp.dtype(dtype).itemsize
    sub = _sublane(dtype)

    if 4 * sub * N * itemsize <= vmem_budget_bytes:
        tn = N  # full-width rows; no column tiling
    else:
        tn = (vmem_budget_bytes // (4 * sub * itemsize)) // _LANE * _LANE
        tn = max(_LANE, min(tn, _round_up(N, _LANE)))
    grid_n = pl.cdiv(N, tn)

    row_bytes = tn * itemsize
    # 2 buffers x (in tile + out tile) = 4 * tm * row_bytes must fit the budget.
    tm_cap = max(sub, (vmem_budget_bytes // (4 * row_bytes)) // sub * sub)
    tm = max(sub, min(tm_cap, (target_tile_bytes // row_bytes) // sub * sub))
    tm = min(tm, _round_up(M, sub))

    # Keep enough grid steps for megacore sharding + pipeline overlap.
    if pl.cdiv(M, tm) * grid_n < min_grid_steps and M > sub:
        rows_needed = pl.cdiv(min_grid_steps, grid_n)
        tm = max(sub, _round_up(pl.cdiv(M, rows_needed), sub))
    grid_m = pl.cdiv(M, tm)
    return tm, tn, grid_m, grid_n


def _forward_2d(x, weights, bias, *,
                target_tile_bytes, vmem_budget_bytes, min_grid_steps, donate_x):
    M, N = x.shape
    itemsize = jnp.dtype(x.dtype).itemsize

    tm, tn, grid_m, grid_n = _choose_tiles(
        M, N, x.dtype,
        target_tile_bytes=target_tile_bytes,
        vmem_budget_bytes=vmem_budget_bytes,
        min_grid_steps=min_grid_steps)

    # Explicit VMEM sizing: 2 buffers x (in tile + out tile) + slack.
    # Cap at 48 MiB so the same setup fits v7x's 64 MiB physical VMEM and stays
    # above v5e's 16 MiB default scoped limit.
    vmem_needed = 4 * tm * tn * itemsize
    vmem_limit = int(min(48 << 20, max(vmem_needed + (2 << 20), 16 << 20)))

    w = jnp.asarray(weights, dtype=jnp.float32).reshape(1)
    b = jnp.asarray(bias, dtype=jnp.float32).reshape(1)

    return pl.pallas_call(
        _linreg_kernel,
        out_shape=jax.ShapeDtypeStruct((M, N), x.dtype),
        grid_spec=pl.GridSpec(
            grid=(grid_m, grid_n),
            in_specs=[
                pl.BlockSpec(memory_space=pltpu.MemorySpace.SMEM),   # weights (1,)
                pl.BlockSpec(memory_space=pltpu.MemorySpace.SMEM),   # bias    (1,)
                pl.BlockSpec((tm, tn), lambda i, j: (i, j)),         # x tile
            ],
            out_specs=pl.BlockSpec((tm, tn), lambda i, j: (i, j)),
        ),
        compiler_params=pltpu.CompilerParams(
            dimension_semantics=("parallel", "parallel"),
            vmem_limit_bytes=vmem_limit,
        ),
        input_output_aliases=({2: 0} if donate_x else {}),
    )(w, b, x)


def linear_regression_forward(x, weights, bias, *,
                              target_tile_bytes=8 << 20,    # ~8 MiB/tile (v6e/v7x sweet spot)
                              vmem_budget_bytes=40 << 20,   # double-buffered in+out budget
                              min_grid_steps=4,             # >= 2 steps per v7x TensorCore
                              donate_x=False):              # alias y into x's HBM buffer
    """y = weights * x + bias (broadcast of shape-(1,) params), any-rank x."""
    x = jnp.asarray(x)
    orig_shape = x.shape
    if x.ndim == 0:
        x2d = x.reshape(1, 1)
    elif x.ndim == 1:
        x2d = x.reshape(1, -1)
    elif x.ndim == 2:
        x2d = x
    else:
        # Row-major-preserving reshape: layout-only, no extra HBM pass.
        x2d = x.reshape(-1, orig_shape[-1])

    y2d = _forward_2d(x2d, weights, bias,
                      target_tile_bytes=target_tile_bytes,
                      vmem_budget_bytes=vmem_budget_bytes,
                      min_grid_steps=min_grid_steps,
                      donate_x=donate_x)
    return y2d.reshape(orig_shape)


if __name__ == "__main__":
    # nn.Parameter(torch.zeros(1)) is zeros; use small nonzero deterministic
    # values so the kernel does real work.
    weights = jnp.array([0.5], dtype=jnp.float32)
    bias = jnp.array([-1.25], dtype=jnp.float32)

    key = jax.random.PRNGKey(0)
    k0, k1, k2 = jax.random.split(key, 3)

    # Aligned shape.
    x = jax.random.normal(k0, (128, 256), dtype=jnp.float32)
    y = jax.block_until_ready(linear_regression_forward(x, weights, bias))
    y_ref = weights[0] * x + bias[0]
    assert y.shape == x.shape and y.dtype == x.dtype
    assert jnp.allclose(y, y_ref, atol=1e-6), "mismatch vs reference (aligned)"

    # Non-divisible rows + non-lane-aligned columns: exercises the ragged
    # last-block path (no wrapper pad / slice).
    x2 = jax.random.normal(k1, (100, 200), dtype=jnp.float32)
    y2 = jax.block_until_ready(linear_regression_forward(x2, weights, bias))
    y2_ref = weights[0] * x2 + bias[0]
    assert y2.shape == x2.shape and y2.dtype == x2.dtype
    assert jnp.allclose(y2, y2_ref, atol=1e-6), "mismatch vs reference (ragged rows)"

    # Wide rows with a deliberately tiny VMEM budget: exercises the 2-D
    # (rows x 128-multiple column tiles) fallback with a ragged column tail.
    x3 = jax.random.normal(k2, (16, 1000), dtype=jnp.float32)
    y3 = jax.block_until_ready(linear_regression_forward(
        x3, weights, bias, target_tile_bytes=64 * 1024, vmem_budget_bytes=96 * 1024))
    y3_ref = weights[0] * x3 + bias[0]
    assert y3.shape == x3.shape and y3.dtype == x3.dtype
    assert jnp.allclose(y3, y3_ref, atol=1e-6), "mismatch vs reference (column-tiled)"

    print("KERNEL_OK")
</pallas_src>

<mosaic_0001>
module attributes {stable_mosaic.version = 11 : i64} {
  func.func @_linreg_kernel(%arg0: i32, %arg1: i32, %arg2: memref<1xf32, #tpu.memory_space<smem>>, %arg3: memref<1xf32, #tpu.memory_space<smem>>, %arg4: memref<32x256xf32, #tpu.memory_space<vmem>>, %arg5: memref<32x256xf32, #tpu.memory_space<vmem>>) attributes {dimension_semantics = [#tpu.dimension_semantics<parallel>, #tpu.dimension_semantics<parallel>], iteration_bounds = array<i64: 4, 1>, scalar_prefetch = 0 : i64, scratch_operands = 0 : i64, tpu.core_type = #tpu.core_type<tc>, window_params = [{transform_indices = @transform_0, window_bounds = array<i64: 1>}, {transform_indices = @transform_1, window_bounds = array<i64: 1>}, {transform_indices = @transform_2, window_bounds = array<i64: 32, 256>}, {transform_indices = @transform_3, window_bounds = array<i64: 32, 256>}]} {
    %c0 = arith.constant 0 : index
    %0 = memref.load %arg2[%c0] : memref<1xf32, #tpu.memory_space<smem>>
    %c0_0 = arith.constant 0 : index
    %c0_1 = arith.constant 0 : index
    %1 = vector.load %arg4[%c0_0, %c0_1] : memref<32x256xf32, #tpu.memory_space<vmem>>, vector<32x256xf32>
    %2 = vector.broadcast %0 : f32 to vector<32x256xf32>
    %3 = arith.mulf %2, %1 : vector<32x256xf32>
    %c0_2 = arith.constant 0 : index
    %4 = memref.load %arg3[%c0_2] : memref<1xf32, #tpu.memory_space<smem>>
    %5 = vector.broadcast %4 : f32 to vector<32x256xf32>
    %6 = arith.addf %3, %5 : vector<32x256xf32>
    %c0_3 = arith.constant 0 : index
    %c0_4 = arith.constant 0 : index
    %7 = vector.load %arg5[%c0_3, %c0_4] : memref<32x256xf32, #tpu.memory_space<vmem>>, vector<32x256xf32>
    tpu.vector_store %arg5[%c0_3, %c0_4], %6 {strides = array<i32>} : memref<32x256xf32, #tpu.memory_space<vmem>>, vector<32x256xf32>,
    return
  }
  func.func @transform_0(%arg0: i32, %arg1: i32) -> i32 {
    %c0_i32 = arith.constant 0 : i32
    %c0_i32_0 = arith.constant 0 : i32
    return %c0_i32 : i32
  }
  func.func @transform_1(%arg0: i32, %arg1: i32) -> i32 {
    %c0_i32 = arith.constant 0 : i32
    %c0_i32_0 = arith.constant 0 : i32
    return %c0_i32 : i32
  }
  func.func @transform_2(%arg0: i32, %arg1: i32) -> (i32, i32) {
    %c0_i32 = arith.constant 0 : i32
    return %arg0, %arg1 : i32, i32
  }
  func.func @transform_3(%arg0: i32, %arg1: i32) -> (i32, i32) {
    %c0_i32 = arith.constant 0 : i32
    return %arg0, %arg1 : i32, i32
  }
}

</mosaic_0001>

<llo_original>
// kernel: tpu_custom_call.1
$region0: #{tpu_custom_call.1}
  #allocation0 [shape = 'u32[]', space=smem, size = 0x4, offset = 0x4, fixed_abs, tag = 'smem constant byte address 0x4 - core index']
  #allocation1 [shape = 'u32[144,128]{1,0:T(1,128)}', space=vmem, size = 0x12000, scoped, tag = 'internal scratch']
  #allocation2 [shape = 'f32[1]{0:T(128)S(6)}', space=smem, size = 0x200, scoped, tag = 'scoped memory for tpu_custom_call.1']
  #allocation3 [shape = 'f32[1]{0:T(128)S(6)}', space=smem, size = 0x200, scoped, tag = 'scoped memory for tpu_custom_call.1']
  %s0 = inlined_call_operand.<no memory space> [shape: f32[1], index: 0, kind: input, shape index: {}]
  %s1 = inlined_call_operand.<no memory space> [shape: f32[1], index: 1, kind: input, shape index: {}]
  %s2 = inlined_call_operand.hbm [shape: f32[128,256], index: 2, kind: input, shape index: {}]
  %s3 = inlined_call_operand.hbm [shape: f32[128,256], index: 3, kind: output, shape index: {}]
  %s4 = sld [smem:[#allocation0]]
  $region49: #{tpu_custom_call.1} parent=0
    _
  %s6 = ssub.s32 1, %s4
  %s7 = scalar_select 0, %s6, %s4
  %8 = sst [smem:[#allocation2]] %s0
  %9 = sst [smem:[#allocation3]] %s1
  $region1: #{tpu_custom_call.1} parent=0
    #allocation4 [shape = 'u8[65536]{0}', space=vmem, size = 0x10000, scoped, tag = 'input window, operand 2']
    #allocation5 [shape = 's32[2]{0}', space=sflag, size = 0x8, scoped, tag = 'scoped memory for tpu_custom_call.1']
    #allocation6 [shape = 's32[2]{0}', space=sflag, size = 0x8, scoped, tag = 'scoped memory for tpu_custom_call.1']
    #allocation7 [shape = 'u8[65536]{0}', space=vmem, size = 0x10000, scoped, tag = 'output window, operand 0']
    %10 = vsyncpa [#allocation5], 0
    %s11 = scalar_lea.sflag [#allocation5], 1
    %12 = vsyncpa %s11, 0
    %13 = vsyncpa [#allocation6], 0
    %s14 = scalar_lea.sflag [#allocation6], 1
    %15 = vsyncpa %s14, 0
    loop: start=0, step=1, limit=6
    $region2: #{tpu_custom_call.1} parent=1 // loop_pre_header
      _
    $region3: #{tpu_custom_call.1} parent=1 // loop_header
      %s17 = sphi 0, %s21
      %p18 = scmp.ge.s32.totalorder %s17, 6
      %s24 = sphi 0, %s36
      %s25 = sphi 0, %s32
      %s26 = sphi 0, %s24
      %s27 = sphi 0, %s25
      %s28 = sphi 0, %s26
      %s29 = sphi 0, %s27
      %s37 = sphi 0, %s37
      %s39 = sphi 0, %s37
      %s40 = sphi 0, %s39
      %s54 = sphi 0, %s40
      %s58 = sphi 0, %s58
      %s60 = sphi 0, %s58
      %s61 = sphi 0, %s60
      %s75 = sphi 0, %s61
      %s83 = sphi 0, %s85
      %s86 = sphi 0, %s83
      %s87 = sphi 0, %s86
      %s103 = sphi 0, %s87
      %s111 = sphi 0, %s113
      %s114 = sphi 0, %s111
      %s115 = sphi 0, %s114
      %s131 = sphi 0, %s115
    $region4: #{tpu_custom_call.1} parent=1 // loop_header_branch
      %20 = sbr.rel (%p18) target = $region8
    $region5: #{tpu_custom_call.1} parent=1 // loop_body
      %s22 = ssub.s32 %s17, 1
      %s23 = ssub.s32 %s17, 2
      %s30 = sadd.s32 1, %s25
      %p31 = scmp.ge.s32.totalorder %s30, 1
      %s32 = scalar_select %p31, 0, %s30
      %s33 = sadd.s32 1, %s24
      %s34 = scalar_select %p31, %s33, %s24
      %p35 = scmp.ge.s32.totalorder %s34, 4
      %s36 = scalar_select %p35, 0, %s34
      %s38 = sadd.s32 %s37, 1
      %p41 = scmp.eq.s32.totalorder %s17, 3
      %p42 = scmp.ne.s32.totalorder %s37, %s39
      %p43 = scmp.eq.s32.totalorder %s17, 0
      %p44 = por %p42, %p43
      %p45 = scmp.ne.s32.totalorder %s37, %s39
      %p46 = scmp.eq.s32.totalorder %s22, 3
      %p47 = por %p45, %p46
      %p48 = scmp.ne.s32.totalorder %s39, %s40
      %p49 = scmp.eq.s32.totalorder %s22, 0
      %p50 = por %p48, %p49
      %p51 = scmp.ne.s32.totalorder %s39, %s40
      %p52 = scmp.eq.s32.totalorder %s23, 3
      %p53 = por %p51, %p52
      %p55 = scmp.ne.s32.totalorder %s40, %s54
      %p56 = scmp.eq.s32.totalorder %s23, 0
      %p57 = por %p55, %p56
      %s59 = sadd.s32 %s58, 1
      %p62 = scmp.eq.s32.totalorder %s17, 3
      %p63 = scmp.ne.s32.totalorder %s58, %s60
      %p64 = scmp.eq.s32.totalorder %s17, 0
      %p65 = por %p63, %p64
      %p66 = scmp.ne.s32.totalorder %s58, %s60
      %p67 = scmp.eq.s32.totalorder %s22, 3
      %p68 = por %p66, %p67
      %p69 = scmp.ne.s32.totalorder %s60, %s61
      %p70 = scmp.eq.s32.totalorder %s22, 0
      %p71 = por %p69, %p70
      %p72 = scmp.ne.s32.totalorder %s60, %s61
      %p73 = scmp.eq.s32.totalorder %s23, 3
      %p74 = por %p72, %p73
      %p76 = scmp.ne.s32.totalorder %s61, %s75
      %p77 = scmp.eq.s32.totalorder %s23, 0
      %p78 = por %p76, %p77
      %s79 = ssub.s32 %s24, %s36
      %s80 = ssub.s32 %s25, %s32
      %s81 = sor.u32 %s79, %s80
      %p82 = scmp.eq.s32.totalorder %s81, 0
      %s84 = sadd.s32 %s83, 1
      %s85 = scalar_select %p82, %s83, %s84
      %p88 = pneg %p82
      %p89 = scmp.eq.s32.totalorder %s17, 3
      %p90 = por %p88, %p89
      %p91 = scmp.ne.s32.totalorder %s83, %s86
      %p92 = scmp.eq.s32.totalorder %s17, 0
      %p93 = por %p91, %p92
      %p94 = scmp.ne.s32.totalorder %s83, %s86
      %p95 = scmp.eq.s32.totalorder %s22, 3
      %p96 = por %p94, %p95
      %p97 = scmp.ne.s32.totalorder %s86, %s87
      %p98 = scmp.eq.s32.totalorder %s22, 0
      %p99 = por %p97, %p98
      %p100 = scmp.ne.s32.totalorder %s86, %s87
      %p101 = scmp.eq.s32.totalorder %s23, 3
      %p102 = por %p100, %p101
      %p104 = scmp.ne.s32.totalorder %s87, %s103
      %p105 = scmp.eq.s32.totalorder %s23, 0
      %p106 = por %p104, %p105
      %s107 = ssub.s32 %s24, %s36
      %s108 = ssub.s32 %s25, %s32
      %s109 = sor.u32 %s107, %s108
      %p110 = scmp.eq.s32.totalorder %s109, 0
      %s112 = sadd.s32 %s111, 1
      %s113 = scalar_select %p110, %s111, %s112
      %p116 = pneg %p110
      %p117 = scmp.eq.s32.totalorder %s17, 3
      %p118 = por %p116, %p117
      %p119 = scmp.ne.s32.totalorder %s111, %s114
      %p120 = scmp.eq.s32.totalorder %s17, 0
      %p121 = por %p119, %p120
      %p122 = scmp.ne.s32.totalorder %s111, %s114
      %p123 = scmp.eq.s32.totalorder %s22, 3
      %p124 = por %p122, %p123
      %p125 = scmp.ne.s32.totalorder %s114, %s115
      %p126 = scmp.eq.s32.totalorder %s22, 0
      %p127 = por %p125, %p126
      %p128 = scmp.ne.s32.totalorder %s114, %s115
      %p129 = scmp.eq.s32.totalorder %s23, 3
      %p130 = por %p128, %p129
      %p132 = scmp.ne.s32.totalorder %s115, %s131
      %p133 = scmp.eq.s32.totalorder %s23, 0
      %p134 = por %p132, %p133
      %p135 = scmp.le.s32.totalorder 1, %s17
      %p136 = scmp.lt.s32.totalorder %s17, 5
      %p137 = pnand %p135, %p136
      %p138 = pneg %p137
      // Predicated region
      $region9: #{tpu_custom_call.1} parent=5 // pred_check
        _
      $region10: #{tpu_custom_call.1} parent=5 // pred_check_branch
        %140 = sbr.rel (%p137) target = $region12
      $region11: #{tpu_custom_call.1} parent=5 // pred_region
        %s141 = ssub.s32 %s17, 1
        // Predicated region
        $region13: #{tpu_custom_call.1} parent=11 // pred_check
          %p142 = pneg %p50
        $region14: #{tpu_custom_call.1} parent=11 // pred_check_branch
          %144 = sbr.rel (%p142) target = $region16
        $region15: #{tpu_custom_call.1} parent=11 // pred_region
          _
        $region16: #{tpu_custom_call.1} parent=11 // pred_fallthru
          _
        // Predicated region
        $region17: #{tpu_custom_call.1} parent=11 // pred_check
          %p145 = pneg %p71
        $region18: #{tpu_custom_call.1} parent=11 // pred_check_branch
          %147 = sbr.rel (%p145) target = $region20
        $region19: #{tpu_custom_call.1} parent=11 // pred_region
          _
        $region20: #{tpu_custom_call.1} parent=11 // pred_fallthru
          _
      $region12: #{tpu_custom_call.1} parent=5 // pred_fallthru
        _
      %p148 = scmp.lt.s32.totalorder %s17, 4
      // Predicated region
      $region21: #{tpu_custom_call.1} parent=5 // pred_check
        %p149 = pneg %p148
      $region22: #{tpu_custom_call.1} parent=5 // pred_check_branch
        %151 = sbr.rel (%p149) target = $region24
      $region23: #{tpu_custom_call.1} parent=5 // pred_region
        // Predicated region
        $region25: #{tpu_custom_call.1} parent=23 // pred_check
          %p152 = pneg %p93
        $region26: #{tpu_custom_call.1} parent=23 // pred_check_branch
          %154 = sbr.rel (%p152) target = $region28
        $region27: #{tpu_custom_call.1} parent=23 // pred_region
          %s155 = sand.u32 %s83, 1
          %s156 = scalar_lea.sflag [#allocation5], %s155
          %s157 = sand.u32 %s83, 1
          %s158 = smul.addr %s157, 64
          %s159 = scalar_lea.vmem [#allocation4], %s158
          %s160 = smul.u32 4, %s24
          %s161 = smul.u32 2, %s25
          %s163 = ssub.s32 1024, 1024
          %164 = vsyncadd %s156, %s163
          %s165 = smul.addr %s160, 2
          %s166 = sadd.s32 %s161, %s165
          %s167 = smul.addr %s166, 128
          %s168 = scalar_lea.hbm %s2, %s167
          %s169 = sshll.u32 %s159, 4
          %s170 = int_to_ptr.vmem [resolvable:$true] %s169
          %175 = dma.hbm_to_vmem [thread:$0]  %s168, 1024, %s170, %s156, 256, 256, 16
        $region28: #{tpu_custom_call.1} parent=23 // pred_fallthru
          _
      $region24: #{tpu_custom_call.1} parent=5 // pred_fallthru
        _
      %p176 = scmp.le.s32.totalorder 1, %s17
      %p177 = scmp.lt.s32.totalorder %s17, 5
      %p178 = pnand %p176, %p177
      %p179 = pneg %p178
      // Predicated region
      $region29: #{tpu_custom_call.1} parent=5 // pred_check
        _
      $region30: #{tpu_custom_call.1} parent=5 // pred_check_branch
        %181 = sbr.rel (%p178) target = $region32
      $region31: #{tpu_custom_call.1} parent=5 // pred_region
        %s182 = ssub.s32 %s17, 1
        %s183 = sand.u32 %s86, 1
        %s184 = scalar_lea.sflag [#allocation5], %s183
        %s185 = sand.u32 %s86, 1
        %s186 = smul.addr %s185, 64
        %s187 = scalar_lea.vmem [#allocation4], %s186
        // Predicated region
        $region33: #{tpu_custom_call.1} parent=31 // pred_check
          %p188 = pneg %p99
        $region34: #{tpu_custom_call.1} parent=31 // pred_check_branch
          %190 = sbr.rel (%p188) target = $region36
        $region35: #{tpu_custom_call.1} parent=31 // pred_region
          %191 = dma.done %s184, 1024
        $region36: #{tpu_custom_call.1} parent=31 // pred_fallthru
          _
        %p192 = pneg %p50
        %p193 = pneg %p47
        %p194 = pneg %p71
        %p195 = pneg %p68
        %s196 = sand.u32 %s86, 1
        %s197 = scalar_lea.sflag [#allocation5], %s196
        %s198 = sand.u32 %s86, 1
        %s199 = smul.addr %s198, 64
        %s200 = scalar_lea.vmem [#allocation4], %s199
        %p201 = pneg %p99
        %p202 = pneg %p96
        %p203 = pneg %p127
        %p204 = pneg %p124
        %s205 = sand.u32 %s114, 1
        %s206 = scalar_lea.sflag [#allocation6], %s205
        %s207 = sand.u32 %s114, 1
        %s208 = smul.addr %s207, 64
        %s209 = scalar_lea.vmem [#allocation7], %s208
        %s210 = smul.u32 4, %s26
        %s211 = smul.u32 2, %s27
        %s212 = smul.u32 4, %s26
        %s213 = smul.u32 2, %s27
        %s214 = sld [smem:[#allocation2]]
        %v215 = vld [vmem:[%s187] sm:$0xff]
        %v216 = vld [vmem:[%s187 + $0x8] sm:$0xff]
        %v217 = vld [vmem:[%s187 + $0x10] sm:$0xff]
        %v218 = vld [vmem:[%s187 + $0x18] sm:$0xff]
        %v219 = vld [vmem:[%s187 + $0x20] sm:$0xff]
        %v220 = vld [vmem:[%s187 + $0x28] sm:$0xff]
        %v221 = vld [vmem:[%s187 + $0x30] sm:$0xff]
        %v222 = vld [vmem:[%s187 + $0x38] sm:$0xff]
        %v223 = vstv %s214
        %v224 = vmul.f32 %v223, %v215
        %v225 = vmul.f32 %v223, %v216
        %v226 = vmul.f32 %v223, %v217
        %v227 = vmul.f32 %v223, %v218
        %v228 = vmul.f32 %v223, %v219
        %v229 = vmul.f32 %v223, %v220
        %v230 = vmul.f32 %v223, %v221
        %v231 = vmul.f32 %v223, %v222
        %s232 = sld [smem:[#allocation3]]
        %v233 = vstv %s232
        %v234 = vadd.f32 %v224, %v233
        %v235 = vadd.f32 %v225, %v233
        %v236 = vadd.f32 %v226, %v233
        %v237 = vadd.f32 %v227, %v233
        %v238 = vadd.f32 %v228, %v233
        %v239 = vadd.f32 %v229, %v233
        %v240 = vadd.f32 %v230, %v233
        %v241 = vadd.f32 %v231, %v233
        %242 = vst [vmem:[%s209] sm:$0xff] %v234
        %243 = vst [vmem:[%s209 + $0x8] sm:$0xff] %v235
        %244 = vst [vmem:[%s209 + $0x10] sm:$0xff] %v236
        %245 = vst [vmem:[%s209 + $0x18] sm:$0xff] %v237
        %246 = vst [vmem:[%s209 + $0x20] sm:$0xff] %v238
        %247 = vst [vmem:[%s209 + $0x28] sm:$0xff] %v239
        %248 = vst [vmem:[%s209 + $0x30] sm:$0xff] %v240
        %249 = vst [vmem:[%s209 + $0x38] sm:$0xff] %v241
        %s250 = sand.u32 %s114, 1
        %s251 = scalar_lea.sflag [#allocation6], %s250
        %s252 = sand.u32 %s114, 1
        %s253 = smul.addr %s252, 64
        %s254 = scalar_lea.vmem [#allocation7], %s253
        // Predicated region
        $region37: #{tpu_custom_call.1} parent=31 // pred_check
          %p255 = pneg %p124
        $region38: #{tpu_custom_call.1} parent=31 // pred_check_branch
          %257 = sbr.rel (%p255) target = $region40
        $region39: #{tpu_custom_call.1} parent=31 // pred_region
          %s258 = smul.u32 4, %s26
          %s259 = smul.u32 2, %s27
          %s261 = ssub.s32 1024, 1024
          %262 = vsyncadd %s251, %s261
          %s263 = smul.addr %s258, 2
          %s264 = sadd.s32 %s259, %s263
          %s265 = smul.addr %s264, 128
          %s266 = scalar_lea.hbm %s3, %s265
          %s267 = sshll.u32 %s254, 4
          %s268 = int_to_ptr.vmem [resolvable:$true] %s267
          %273 = dma.vmem_to_hbm [thread:$0]  %s268, 1024, %s266, %s251, 256, 256, 16
        $region40: #{tpu_custom_call.1} parent=31 // pred_fallthru
          _
      $region32: #{tpu_custom_call.1} parent=5 // pred_fallthru
        _
      %p274 = scmp.le.s32.totalorder 2, %s17
      // Predicated region
      $region41: #{tpu_custom_call.1} parent=5 // pred_check
        %p275 = pneg %p274
      $region42: #{tpu_custom_call.1} parent=5 // pred_check_branch
        %277 = sbr.rel (%p275) target = $region44
      $region43: #{tpu_custom_call.1} parent=5 // pred_region
        %s278 = ssub.s32 %s17, 2
        // Predicated region
        $region45: #{tpu_custom_call.1} parent=43 // pred_check
          %p279 = pneg %p130
        $region46: #{tpu_custom_call.1} parent=43 // pred_check_branch
          %281 = sbr.rel (%p279) target = $region48
        $region47: #{tpu_custom_call.1} parent=43 // pred_region
          %s282 = sand.u32 %s115, 1
          %s283 = scalar_lea.sflag [#allocation6], %s282
          %s284 = sand.u32 %s115, 1
          %s285 = smul.addr %s284, 64
          %s286 = scalar_lea.vmem [#allocation7], %s285
          %287 = dma.done %s283, 1024
        $region48: #{tpu_custom_call.1} parent=43 // pred_fallthru
          _
      $region44: #{tpu_custom_call.1} parent=5 // pred_fallthru
        _
    $region6: #{tpu_custom_call.1} parent=1 // loop_footer
      %s21 = sadd.s32 1, %s17
    $region7: #{tpu_custom_call.1} parent=1 // loop_footer_branch
      %16 = sbr.rel target = $region3
    $region8: #{tpu_custom_call.1} parent=1 // loop_exit
      _
    %288 = vsyncpa [#allocation5], 1
    %s289 = scalar_lea.sflag [#allocation5], 1
    %290 = vsyncpa %s289, 1
    %291 = vsyncpa [#allocation6], 1
    %s292 = scalar_lea.sflag [#allocation6], 1
    %293 = vsyncpa %s292, 1

</llo_original>
